<compile_context>
chip_gen: v7x
topology: tpu7x:2x2x1
jax: 0.10.0
libtpu: 0.0.40
codegen_flags: <defaults>
</compile_context>

<pallas_src>
import numpy as np
import jax
import jax.numpy as jnp
from jax.experimental import pallas as pl
from jax.experimental.pallas import tpu as pltpu


# ---------------------------------------------------------------------------
# Padded-VMEM accounting and tile selection helpers.
# ---------------------------------------------------------------------------
def _round_up(a, b):
    return -(-a // b) * b


def _sublane(itemsize):
    return max(8, 32 // itemsize)            # 8 for f32, 16 for bf16, 32 for i8


def _padded_block_bytes(shape, itemsize):
    """Bytes a block really occupies in VMEM (lane -> 128, sublane -> 8/16/32)."""
    shape = (1,) * max(0, 2 - len(shape)) + tuple(shape)
    lead = 1
    for d in shape[:-2]:
        lead *= d
    return (lead * _round_up(shape[-2], _sublane(itemsize))
            * _round_up(shape[-1], 128) * itemsize)


def _choose_group(H, W, Wo, itemsize, max_s_bytes=1 << 20, lane_target=128):
    """Rows of the image flattened into one VMEM row ('group').

    Must be an even divisor of H (so every group pairs even/odd rows), or H
    itself when H is odd.  Pick the smallest g whose output lane width hg*Wo
    reaches `lane_target` (dense stores) while the selection matrix stays small.
    """
    if H % 2:
        return H
    g = 2
    for cand in range(2, H + 1, 2):
        if H % cand:
            continue
        if _padded_block_bytes((cand * W, (cand // 2) * Wo), itemsize) > max_s_bytes:
            break
        g = cand
        if (cand // 2) * Wo >= lane_target:
            break
    return g


def _selection_matrix(g, W, Wo, dtype):
    """(g*W, hg*Wo) one-hot S with S[r*W + 2j, (r//2)*Wo + j] = 1 for even
    local rows r: flattened-row-group @ S == stride-2 subsample of the group."""
    hg = (g + 1) // 2
    s = np.zeros((g * W, hg * Wo), dtype=np.float32)
    r = np.arange(0, g, 2)[:, None]
    j = np.arange(Wo)[None, :]
    s[(r * W + 2 * j).ravel(), ((r // 2) * Wo + j).ravel()] = 1.0
    return jnp.asarray(s, dtype=dtype)


def _choose_tiles(N, CG, lane_in, lane_out, s_shape, itemsize,
                  budget_bytes=8 << 20):
    """(n_blk, r_blk): padded, double-buffered working set <= budget, and at
    least 2 grid steps when the problem allows it (v7x has 2 TensorCores)."""
    sub = _sublane(itemsize)

    def working_set(n_blk, r_blk):
        in_b = _padded_block_bytes((n_blk, r_blk, lane_in), itemsize)
        out_b = _padded_block_bytes((n_blk, 2, r_blk, lane_out), itemsize)
        s_b = _padded_block_bytes(s_shape, itemsize)
        return 2 * (in_b + out_b + s_b)        # x2: double buffering

    # Row block over the merged (C * G) axis: multiple of the sublane granule
    # (dense sublanes) or the full axis (always legal).
    r_cands = sorted({d for d in range(sub, CG + 1, sub) if CG % d == 0} | {CG},
                     reverse=True)
    r_blk = r_cands[-1]
    for r in r_cands:
        if working_set(1, r) <= budget_bytes:
            r_blk = r
            break

    # Batch tiling: biggest divisor of N that still fits and keeps >=2 steps.
    n_blk = 1
    if r_blk % sub == 0:                       # keep the in-kernel reshape free
        for cand in sorted((d for d in range(1, N + 1) if N % d == 0),
                           reverse=True):
            steps = (N // cand) * (CG // r_blk)
            if working_set(cand, r_blk) <= budget_bytes and (steps >= 2 or cand == 1):
                n_blk = cand
                break
    return n_blk, r_blk


# ---------------------------------------------------------------------------
# Kernel.
# ---------------------------------------------------------------------------
def _downsample_a_kernel(x_ref, s_ref, o_ref):
    """x_ref: (n_blk, r_blk, g*W) flattened row groups of the real channels.
       s_ref: (g*W, hg*Wo) one-hot stride-2 selection matrix.
       o_ref: (n_blk, 2, r_blk, hg*Wo); [:, 0] = subsample, [:, 1] = zeros."""
    n_blk, r_blk, gw = x_ref.shape
    prec = (jax.lax.Precision.HIGHEST
            if x_ref.dtype == jnp.float32 else jax.lax.Precision.DEFAULT)
    x = x_ref[...].reshape(n_blk * r_blk, gw)
    y = jnp.dot(x, s_ref[...], precision=prec,
                preferred_element_type=jnp.float32)
    y = y.astype(o_ref.dtype).reshape(n_blk, r_blk, y.shape[-1])
    o_ref[:, 0, :, :] = y                       # data half
    o_ref[:, 1, :, :] = jnp.zeros_like(y)       # zero half (never read from HBM)


# ---------------------------------------------------------------------------
# Wrapper.
# ---------------------------------------------------------------------------
def downsample_a(x):
    """x: (N, C, H, W) -> (N, 2C, ceil(H/2), ceil(W/2)); channels [C, 2C) zero."""
    N, C, H, W = x.shape
    Ho, Wo = (H + 1) // 2, (W + 1) // 2
    itemsize = jnp.dtype(x.dtype).itemsize

    g = _choose_group(H, W, Wo, itemsize)       # rows per group (divides H)
    G = H // g                                  # groups per channel
    hg = (g + 1) // 2                           # output rows per group
    lane_in, lane_out = g * W, hg * Wo
    CG = C * G

    S = _selection_matrix(g, W, Wo, x.dtype)
    n_blk, r_blk = _choose_tiles(N, CG, lane_in, lane_out, S.shape, itemsize)

    x_rows = x.reshape(N, CG, lane_in)          # free view of NCHW
    grid = (N // n_blk, CG // r_blk)

    cost = pl.CostEstimate(
        flops=2 * N * CG * lane_in * lane_out,
        transcendentals=0,
        bytes_accessed=(x_rows.size + S.size + N * 2 * CG * lane_out) * itemsize,
    )

    out = pl.pallas_call(
        _downsample_a_kernel,
        out_shape=jax.ShapeDtypeStruct((N, 2, CG, lane_out), x.dtype),
        grid=grid,
        in_specs=[
            pl.BlockSpec((n_blk, r_blk, lane_in), lambda n, r: (n, r, 0)),
            pl.BlockSpec((lane_in, lane_out), lambda n, r: (0, 0)),
        ],
        out_specs=pl.BlockSpec((n_blk, 2, r_blk, lane_out),
                               lambda n, r: (n, 0, r, 0)),
        compiler_params=pltpu.CompilerParams(
            dimension_semantics=("parallel", "parallel"),
            vmem_limit_bytes=32 * 1024 * 1024,
        ),
        cost_estimate=cost,
    )(x_rows, S)

    # Free view back to NCHW: channels [0, C) carry the subsample, [C, 2C) the
    # zeros == torch.cat((y, y.mul(0)), dim=1).
    return out.reshape(N, 2 * C, Ho, Wo)


if __name__ == "__main__":
    # DownsampleA has no learnable parameters (AvgPool(k=1, s=2) + zero concat).
    key = jax.random.PRNGKey(0)
    N, C, H, W = 2, 4, 16, 16
    x = jax.random.normal(key, (N, C, H, W), dtype=jnp.float32)

    out = jax.block_until_ready(downsample_a(x))

    # Pure-JAX reference.
    y = x[:, :, ::2, ::2]
    ref = jnp.concatenate([y, jnp.zeros_like(y)], axis=1)

    assert out.shape == ref.shape, (out.shape, ref.shape)
    assert jnp.array_equal(out, ref), "mismatch vs reference"

    print("KERNEL_OK")
</pallas_src>

<mosaic_0001>
module attributes {stable_mosaic.version = 11 : i64} {
  func.func @_downsample_a_kernel(%arg0: i32, %arg1: i32, %arg2: memref<1x4x256xf32, #tpu.memory_space<vmem>>, %arg3: memref<256x64xf32, #tpu.memory_space<vmem>>, %arg4: memref<1x2x4x64xf32, #tpu.memory_space<vmem>>) attributes {dimension_semantics = [#tpu.dimension_semantics<parallel>, #tpu.dimension_semantics<parallel>], iteration_bounds = array<i64: 2, 1>, scalar_prefetch = 0 : i64, scratch_operands = 0 : i64, tpu.core_type = #tpu.core_type<tc>, window_params = [{transform_indices = @transform_0, window_bounds = array<i64: 1, 4, 256>}, {pipeline_mode = #tpu.pipeline_mode<synchronous>, transform_indices = @transform_1, window_bounds = array<i64: 256, 64>}, {transform_indices = @transform_2, window_bounds = array<i64: 1, 2, 4, 64>}]} {
    %c0 = arith.constant 0 : index
    %c0_0 = arith.constant 0 : index
    %c0_1 = arith.constant 0 : index
    %0 = vector.load %arg2[%c0, %c0_0, %c0_1] : memref<1x4x256xf32, #tpu.memory_space<vmem>>, vector<1x4x256xf32>
    %1 = vector.shape_cast %0 : vector<1x4x256xf32> to vector<4x256xf32>
    %c0_2 = arith.constant 0 : index
    %c0_3 = arith.constant 0 : index
    %2 = vector.load %arg3[%c0_2, %c0_3] : memref<256x64xf32, #tpu.memory_space<vmem>>, vector<256x64xf32>
    %cst = arith.constant dense<0.000000e+00> : vector<4x64xf32>
    %3 = tpu.matmul %1, %2, %cst {dimension_numbers = #tpu.dot_dimension_numbers<[1], [0], [0], [1], [0, 0, 1, 1], [], []>, precision = #tpu.contract_precision<fp32>} : vector<4x256xf32>, vector<256x64xf32>, vector<4x64xf32> -> vector<4x64xf32>
    %4 = vector.shape_cast %3 : vector<4x64xf32> to vector<1x4x64xf32>
    %c0_4 = arith.constant 0 : index
    %c0_5 = arith.constant 0 : index
    %c0_6 = arith.constant 0 : index
    %c0_7 = arith.constant 0 : index
    %5 = vector.load %arg4[%c0_4, %c0_5, %c0_6, %c0_7] : memref<1x2x4x64xf32, #tpu.memory_space<vmem>>, vector<1x1x4x64xf32>
    %6 = vector.shape_cast %5 : vector<1x1x4x64xf32> to vector<1x4x64xf32>
    %7 = vector.shape_cast %4 : vector<1x4x64xf32> to vector<1x1x4x64xf32>
    tpu.vector_store %arg4[%c0_4, %c0_5, %c0_6, %c0_7], %7 {strides = array<i32>} : memref<1x2x4x64xf32, #tpu.memory_space<vmem>>, vector<1x1x4x64xf32>,
    %cst_8 = arith.constant 0.000000e+00 : f32
    %8 = vector.broadcast %cst_8 : f32 to vector<1x4x64xf32>
    %c0_9 = arith.constant 0 : index
    %c1 = arith.constant 1 : index
    %c0_10 = arith.constant 0 : index
    %c0_11 = arith.constant 0 : index
    %9 = vector.load %arg4[%c0_9, %c1, %c0_10, %c0_11] : memref<1x2x4x64xf32, #tpu.memory_space<vmem>>, vector<1x1x4x64xf32>
    %10 = vector.shape_cast %9 : vector<1x1x4x64xf32> to vector<1x4x64xf32>
    %11 = vector.shape_cast %8 : vector<1x4x64xf32> to vector<1x1x4x64xf32>
    tpu.vector_store %arg4[%c0_9, %c1, %c0_10, %c0_11], %11 {strides = array<i32>} : memref<1x2x4x64xf32, #tpu.memory_space<vmem>>, vector<1x1x4x64xf32>,
    return
  }
  func.func @transform_0(%arg0: i32, %arg1: i32) -> (i32, i32, i32) {
    %c0_i32 = arith.constant 0 : i32
    %c0_i32_0 = arith.constant 0 : i32
    return %arg0, %arg1, %c0_i32 : i32, i32, i32
  }
  func.func @transform_1(%arg0: i32, %arg1: i32) -> (i32, i32) {
    %c0_i32 = arith.constant 0 : i32
    %c0_i32_0 = arith.constant 0 : i32
    %c0_i32_1 = arith.constant 0 : i32
    return %c0_i32, %c0_i32_0 : i32, i32
  }
  func.func @transform_2(%arg0: i32, %arg1: i32) -> (i32, i32, i32, i32) {
    %c0_i32 = arith.constant 0 : i32
    %c0_i32_0 = arith.constant 0 : i32
    %c0_i32_1 = arith.constant 0 : i32
    return %arg0, %c0_i32, %arg1, %c0_i32_0 : i32, i32, i32, i32
  }
}

</mosaic_0001>

<llo_original>
// kernel: tpu_custom_call.1
$region0: #{tpu_custom_call.1}
  #allocation0 [shape = 'u32[]', space=smem, size = 0x4, offset = 0x4, fixed_abs, tag = 'smem constant byte address 0x4 - core index']
  #allocation1 [shape = 'u32[144,128]{1,0:T(1,128)}', space=vmem, size = 0x12000, scoped, tag = 'internal scratch']
  %s0 = inlined_call_operand.vmem [shape: f32[2,4,256], index: 0, kind: input, shape index: {}]
  %s1 = inlined_call_operand.vmem [shape: f32[256,64], index: 1, kind: input, shape index: {}]
  %s2 = inlined_call_operand.hbm [shape: f32[2,2,4,64], index: 2, kind: output, shape index: {}]
  %s3 = sld [smem:[#allocation0]]
  $region41: #{tpu_custom_call.1} parent=0
    _
  %s5 = ssub.s32 1, %s3
  %s6 = scalar_select 0, %s5, %s3
  $region1: #{tpu_custom_call.1} parent=0
    #allocation2 [shape = 'u8[8192]{0}', space=vmem, size = 0x2000, scoped, tag = 'output window, operand 0']
    #allocation3 [shape = 's32[2]{0}', space=sflag, size = 0x8, scoped, tag = 'scoped memory for tpu_custom_call.1']
    %7 = vsyncpa [#allocation3], 0
    %s8 = scalar_lea.sflag [#allocation3], 1
    %9 = vsyncpa %s8, 0
    loop: start=0, step=1, limit=4
    $region2: #{tpu_custom_call.1} parent=1 // loop_pre_header
      _
    $region3: #{tpu_custom_call.1} parent=1 // loop_header
      %s11 = sphi 0, %s15
      %p12 = scmp.ge.s32.totalorder %s11, 4
      %s18 = sphi 0, %s30
      %s19 = sphi 0, %s26
      %s20 = sphi 0, %s18
      %s21 = sphi 0, %s19
      %s22 = sphi 0, %s20
      %s23 = sphi 0, %s21
      %s35 = sphi 0, %s37
      %s38 = sphi 0, %s35
      %s39 = sphi 0, %s38
      %s55 = sphi 0, %s39
      %s59 = sphi 0, %s59
      %s61 = sphi 0, %s59
      %s62 = sphi 0, %s61
      %s76 = sphi 0, %s62
      %s84 = sphi 0, %s86
      %s87 = sphi 0, %s84
      %s88 = sphi 0, %s87
      %s104 = sphi 0, %s88
    $region4: #{tpu_custom_call.1} parent=1 // loop_header_branch
      %14 = sbr.rel (%p12) target = $region8
    $region5: #{tpu_custom_call.1} parent=1 // loop_body
      %s16 = ssub.s32 %s11, 1
      %s17 = ssub.s32 %s11, 2
      %s24 = sadd.s32 1, %s19
      %p25 = scmp.ge.s32.totalorder %s24, 1
      %s26 = scalar_select %p25, 0, %s24
      %s27 = sadd.s32 1, %s18
      %s28 = scalar_select %p25, %s27, %s18
      %p29 = scmp.ge.s32.totalorder %s28, 2
      %s30 = scalar_select %p29, 0, %s28
      %s31 = ssub.s32 %s18, %s30
      %s32 = ssub.s32 %s19, %s26
      %s33 = sor.u32 %s31, %s32
      %p34 = scmp.eq.s32.totalorder %s33, 0
      %s36 = sadd.s32 %s35, 1
      %s37 = scalar_select %p34, %s35, %s36
      %p40 = pneg %p34
      %p41 = scmp.eq.s32.totalorder %s11, 1
      %p42 = por %p40, %p41
      %p43 = scmp.ne.s32.totalorder %s35, %s38
      %p44 = scmp.eq.s32.totalorder %s11, 0
      %p45 = por %p43, %p44
      %p46 = scmp.ne.s32.totalorder %s35, %s38
      %p47 = scmp.eq.s32.totalorder %s16, 1
      %p48 = por %p46, %p47
      %p49 = scmp.ne.s32.totalorder %s38, %s39
      %p50 = scmp.eq.s32.totalorder %s16, 0
      %p51 = por %p49, %p50
      %p52 = scmp.ne.s32.totalorder %s38, %s39
      %p53 = scmp.eq.s32.totalorder %s17, 1
      %p54 = por %p52, %p53
      %p56 = scmp.ne.s32.totalorder %s39, %s55
      %p57 = scmp.eq.s32.totalorder %s17, 0
      %p58 = por %p56, %p57
      %s60 = sadd.s32 %s59, 1
      %p63 = scmp.eq.s32.totalorder %s11, 1
      %p64 = scmp.ne.s32.totalorder %s59, %s61
      %p65 = scmp.eq.s32.totalorder %s11, 0
      %p66 = por %p64, %p65
      %p67 = scmp.ne.s32.totalorder %s59, %s61
      %p68 = scmp.eq.s32.totalorder %s16, 1
      %p69 = por %p67, %p68
      %p70 = scmp.ne.s32.totalorder %s61, %s62
      %p71 = scmp.eq.s32.totalorder %s16, 0
      %p72 = por %p70, %p71
      %p73 = scmp.ne.s32.totalorder %s61, %s62
      %p74 = scmp.eq.s32.totalorder %s17, 1
      %p75 = por %p73, %p74
      %p77 = scmp.ne.s32.totalorder %s62, %s76
      %p78 = scmp.eq.s32.totalorder %s17, 0
      %p79 = por %p77, %p78
      %s80 = ssub.s32 %s18, %s30
      %s81 = ssub.s32 %s19, %s26
      %s82 = sor.u32 %s80, %s81
      %p83 = scmp.eq.s32.totalorder %s82, 0
      %s85 = sadd.s32 %s84, 1
      %s86 = scalar_select %p83, %s84, %s85
      %p89 = pneg %p83
      %p90 = scmp.eq.s32.totalorder %s11, 1
      %p91 = por %p89, %p90
      %p92 = scmp.ne.s32.totalorder %s84, %s87
      %p93 = scmp.eq.s32.totalorder %s11, 0
      %p94 = por %p92, %p93
      %p95 = scmp.ne.s32.totalorder %s84, %s87
      %p96 = scmp.eq.s32.totalorder %s16, 1
      %p97 = por %p95, %p96
      %p98 = scmp.ne.s32.totalorder %s87, %s88
      %p99 = scmp.eq.s32.totalorder %s16, 0
      %p100 = por %p98, %p99
      %p101 = scmp.ne.s32.totalorder %s87, %s88
      %p102 = scmp.eq.s32.totalorder %s17, 1
      %p103 = por %p101, %p102
      %p105 = scmp.ne.s32.totalorder %s88, %s104
      %p106 = scmp.eq.s32.totalorder %s17, 0
      %p107 = por %p105, %p106
      %p108 = scmp.le.s32.totalorder 1, %s11
      %p109 = scmp.lt.s32.totalorder %s11, 3
      %p110 = pnand %p108, %p109
      %p111 = pneg %p110
      // Predicated region
      $region9: #{tpu_custom_call.1} parent=5 // pred_check
        _
      $region10: #{tpu_custom_call.1} parent=5 // pred_check_branch
        %113 = sbr.rel (%p110) target = $region12
      $region11: #{tpu_custom_call.1} parent=5 // pred_region
        %s114 = ssub.s32 %s11, 1
        // Predicated region
        $region13: #{tpu_custom_call.1} parent=11 // pred_check
          %p115 = pneg %p72
        $region14: #{tpu_custom_call.1} parent=11 // pred_check_branch
          %117 = sbr.rel (%p115) target = $region16
        $region15: #{tpu_custom_call.1} parent=11 // pred_region
          _
        $region16: #{tpu_custom_call.1} parent=11 // pred_fallthru
          _
      $region12: #{tpu_custom_call.1} parent=5 // pred_fallthru
        _
      %p118 = scmp.lt.s32.totalorder %s11, 2
      // Predicated region
      $region17: #{tpu_custom_call.1} parent=5 // pred_check
        %p119 = pneg %p118
      $region18: #{tpu_custom_call.1} parent=5 // pred_check_branch
        %121 = sbr.rel (%p119) target = $region20
      $region19: #{tpu_custom_call.1} parent=5 // pred_region
        // Predicated region
        $region21: #{tpu_custom_call.1} parent=19 // pred_check
          %p122 = pneg %p45
        $region22: #{tpu_custom_call.1} parent=19 // pred_check_branch
          %124 = sbr.rel (%p122) target = $region24
        $region23: #{tpu_custom_call.1} parent=19 // pred_region
          %p125 = scmp.lt.s32.totalorder %s18, 1
          %s126 = scalar_select %p125, %s18, 1
          %p127 = scmp.lt.s32.totalorder %s19, 0
          %s128 = scalar_select %p127, %s19, 0
          %s129 = smul.addr %s128, 2
          %s130 = smul.addr %s126, 2
          %s131 = sadd.s32 %s129, %s130
          %s132 = smul.addr %s131, 4
          %s133 = scalar_lea.vmem %s0, %s132
        $region24: #{tpu_custom_call.1} parent=19 // pred_fallthru
          _
      $region20: #{tpu_custom_call.1} parent=5 // pred_fallthru
        _
      %p134 = scmp.le.s32.totalorder 1, %s11
      %p135 = scmp.lt.s32.totalorder %s11, 3
      %p136 = pnand %p134, %p135
      %p137 = pneg %p136
      // Predicated region
      $region25: #{tpu_custom_call.1} parent=5 // pred_check
        _
      $region26: #{tpu_custom_call.1} parent=5 // pred_check_branch
        %139 = sbr.rel (%p136) target = $region28
      $region27: #{tpu_custom_call.1} parent=5 // pred_region
        %s140 = ssub.s32 %s11, 1
        %p141 = scmp.lt.s32.totalorder %s20, 1
        %s142 = scalar_select %p141, %s20, 1
        %p143 = scmp.lt.s32.totalorder %s21, 0
        %s144 = scalar_select %p143, %s21, 0
        %s145 = smul.addr %s144, 2
        %s146 = smul.addr %s142, 2
        %s147 = sadd.s32 %s145, %s146
        %s148 = smul.addr %s147, 4
        %s149 = scalar_lea.vmem %s0, %s148
        %p150 = pneg %p51
        %p151 = pneg %p48
        %p152 = pneg %p72
        %p153 = pneg %p69
        %p154 = pneg %p100
        %p155 = pneg %p97
        %s156 = sand.u32 %s87, 1
        %s157 = scalar_lea.sflag [#allocation3], %s156
        %s158 = sand.u32 %s87, 1
        %s159 = smul.addr %s158, 8
        %s160 = scalar_lea.vmem [#allocation2], %s159
        %p161 = scmp.lt.s32.totalorder %s20, 1
        %s162 = scalar_select %p161, %s20, 1
        %p163 = scmp.lt.s32.totalorder %s21, 0
        %s164 = scalar_select %p163, %s21, 0
        %s165 = smul.addr %s164, 2
        %s166 = smul.addr %s162, 2
        %s167 = sadd.s32 %s165, %s166
        %s168 = smul.addr %s167, 4
        %s169 = scalar_lea.vmem %s0, %s168
        %v170 = vld [vmem:[%s169] sm:$0xff]
        %v171 = vld [vmem:[%s1] sm:$0xff]
        %v172 = vld [vmem:[%s1 + $0x8] sm:$0xff]
        %v173 = vld [vmem:[%s1 + $0x10] sm:$0xff]
        %v174 = vld [vmem:[%s1 + $0x18] sm:$0xff]
        %v175 = vld [vmem:[%s1 + $0x20] sm:$0xff]
        %v176 = vld [vmem:[%s1 + $0x28] sm:$0xff]
        %v177 = vld [vmem:[%s1 + $0x30] sm:$0xff]
        %v178 = vld [vmem:[%s1 + $0x38] sm:$0xff]
        %v179 = vld [vmem:[%s1 + $0x40] sm:$0xff]
        %v180 = vld [vmem:[%s1 + $0x48] sm:$0xff]
        %v181 = vld [vmem:[%s1 + $0x50] sm:$0xff]
        %v182 = vld [vmem:[%s1 + $0x58] sm:$0xff]
        %v183 = vld [vmem:[%s1 + $0x60] sm:$0xff]
        %v184 = vld [vmem:[%s1 + $0x68] sm:$0xff]
        %v185 = vld [vmem:[%s1 + $0x70] sm:$0xff]
        %v186 = vld [vmem:[%s1 + $0x78] sm:$0xff]
        %v187 = vld [vmem:[%s1 + $0x80] sm:$0xff]
        %v188 = vld [vmem:[%s1 + $0x88] sm:$0xff]
        %v189 = vld [vmem:[%s1 + $0x90] sm:$0xff]
        %v190 = vld [vmem:[%s1 + $0x98] sm:$0xff]
        %v191 = vld [vmem:[%s1 + $0xa0] sm:$0xff]
        %v192 = vld [vmem:[%s1 + $0xa8] sm:$0xff]
        %v193 = vld [vmem:[%s1 + $0xb0] sm:$0xff]
        %v194 = vld [vmem:[%s1 + $0xb8] sm:$0xff]
        %v195 = vld [vmem:[%s1 + $0xc0] sm:$0xff]
        %v196 = vld [vmem:[%s1 + $0xc8] sm:$0xff]
        %v197 = vld [vmem:[%s1 + $0xd0] sm:$0xff]
        %v198 = vld [vmem:[%s1 + $0xd8] sm:$0xff]
        %v199 = vld [vmem:[%s1 + $0xe0] sm:$0xff]
        %v200 = vld [vmem:[%s1 + $0xe8] sm:$0xff]
        %v201 = vld [vmem:[%s1 + $0xf0] sm:$0xff]
        %v202 = vld [vmem:[%s1 + $0xf8] sm:$0xff]
        %v204 = vcombine.high %v170, %v170
        %206 = vmatprep.subr.mxu0 0.0
        %v207 = vand.u32 %v171, 4294901760
        %208 = vmatpush1.msra.mxu0 %v207
        %209 = vmatprep.subr.mxu0 0.0
        %v210 = vand.u32 %v172, 4294901760
        %211 = vmatpush1.msra.mxu0 %v210
        %212 = vmatprep.subr.mxu0 0.0
        %v213 = vand.u32 %v173, 4294901760
        %214 = vmatpush1.msra.mxu0 %v213
        %215 = vmatprep.subr.mxu0 0.0
        %v216 = vand.u32 %v174, 4294901760
        %217 = vmatpush1.msra.mxu0 %v216
        %218 = vmatprep.subr.mxu0 0.0
        %v219 = vand.u32 %v175, 4294901760
        %220 = vmatpush1.msra.mxu0 %v219
        %221 = vmatprep.subr.mxu0 0.0
        %v222 = vand.u32 %v176, 4294901760
        %223 = vmatpush1.msra.mxu0 %v222
        %224 = vmatprep.subr.mxu0 0.0
        %v225 = vand.u32 %v177, 4294901760
        %226 = vmatpush1.msra.mxu0 %v225
        %227 = vmatprep.subr.mxu0 0.0
        %v228 = vand.u32 %v178, 4294901760
        %229 = vmatpush1.msra.mxu0 %v228
        %230 = vmatprep.subr.mxu0 0.0
        %v231 = vand.u32 %v179, 4294901760
        %232 = vmatpush1.msra.mxu0 %v231
        %233 = vmatprep.subr.mxu0 0.0
        %v234 = vand.u32 %v180, 4294901760
        %235 = vmatpush1.msra.mxu0 %v234
        %236 = vmatprep.subr.mxu0 0.0
        %v237 = vand.u32 %v181, 4294901760
        %238 = vmatpush1.msra.mxu0 %v237
        %239 = vmatprep.subr.mxu0 0.0
        %v240 = vand.u32 %v182, 4294901760
        %241 = vmatpush1.msra.mxu0 %v240
        %242 = vmatprep.subr.mxu0 0.0
        %v243 = vand.u32 %v183, 4294901760
        %244 = vmatpush1.msra.mxu0 %v243
        %245 = vmatprep.subr.mxu0 0.0
        %v246 = vand.u32 %v184, 4294901760
        %247 = vmatpush1.msra.mxu0 %v246
        %248 = vmatprep.subr.mxu0 0.0
        %v249 = vand.u32 %v185, 4294901760
        %250 = vmatpush1.msra.mxu0 %v249
        %251 = vmatprep.subr.mxu0 0.0
        %v252 = vand.u32 %v186, 4294901760
        %253 = vmatpush1.msra.mxu0 %v252
        %254 = vmatprep.subr.mxu0 0.0
        %v255 = vand.u32 %v187, 4294901760
        %256 = vmatpush1.msra.mxu0 %v255
        %257 = vmatprep.subr.mxu0 0.0
        %v258 = vand.u32 %v188, 4294901760
        %259 = vmatpush1.msra.mxu0 %v258
        %260 = vmatprep.subr.mxu0 0.0
        %v261 = vand.u32 %v189, 4294901760
        %262 = vmatpush1.msra.mxu0 %v261
        %263 = vmatprep.subr.mxu0 0.0
        %v264 = vand.u32 %v190, 4294901760
        %265 = vmatpush1.msra.mxu0 %v264
        %266 = vmatprep.subr.mxu0 0.0
        %v267 = vand.u32 %v191, 4294901760
        %268 = vmatpush1.msra.mxu0 %v267
        %269 = vmatprep.subr.mxu0 0.0
        %v270 = vand.u32 %v192, 4294901760
        %271 = vmatpush1.msra.mxu0 %v270
        %272 = vmatprep.subr.mxu0 0.0
        %v273 = vand.u32 %v193, 4294901760
        %274 = vmatpush1.msra.mxu0 %v273
        %275 = vmatprep.subr.mxu0 0.0
        %v276 = vand.u32 %v194, 4294901760
        %277 = vmatpush1.msra.mxu0 %v276
        %278 = vmatprep.subr.mxu0 0.0
        %v279 = vand.u32 %v195, 4294901760
        %280 = vmatpush1.msra.mxu0 %v279
        %281 = vmatprep.subr.mxu0 0.0
        %v282 = vand.u32 %v196, 4294901760
        %283 = vmatpush1.msra.mxu0 %v282
        %284 = vmatprep.subr.mxu0 0.0
        %v285 = vand.u32 %v197, 4294901760
        %286 = vmatpush1.msra.mxu0 %v285
        %287 = vmatprep.subr.mxu0 0.0
        %v288 = vand.u32 %v198, 4294901760
        %289 = vmatpush1.msra.mxu0 %v288
        %290 = vmatprep.subr.mxu0 0.0
        %v291 = vand.u32 %v199, 4294901760
        %292 = vmatpush1.msra.mxu0 %v291
        %293 = vmatprep.subr.mxu0 0.0
        %v294 = vand.u32 %v200, 4294901760
        %295 = vmatpush1.msra.mxu0 %v294
        %296 = vmatprep.subr.mxu0 0.0
        %v297 = vand.u32 %v201, 4294901760
        %298 = vmatpush1.msra.mxu0 %v297
        %299 = vmatprep.subr.mxu0 0.0
        %v300 = vand.u32 %v202, 4294901760
        %301 = vmatpush1.msra.mxu0 %v300
        %v302 = vand.u32 %v204, 4294901760
        %v303 = vsub.f32 %v204, %v302
        %v304 = vand.u32 %v303, 4294901760
        %v305 = vsub.f32 %v303, %v304
        %v306 = vand.u32 %v305, 4294901760
        %307 = vmatprep.mubr.f32.mxu0 %v306
        %v308 = vand.u32 %v170, 4294901760
        %v309 = vsub.f32 %v170, %v308
        %v310 = vand.u32 %v309, 4294901760
        %v311 = vsub.f32 %v309, %v310
        %v312 = vand.u32 %v311, 4294901760
        %313 = vmatmul.mubr.f32.gmra.mrb[0].mxu0 %v312
        %v314 = vpop.f32.mrb[0].mxu0
        %v315 = vadd.f32 0.0, %v314
        %v316 = vpop.f32.mrb[0].mxu0
        %317 = vdwg.mxu0
        %318 = vmatprep.subr.mxu0 0.0
        %v319 = vand.u32 %v171, 4294901760
        %v320 = vsub.f32 %v171, %v319
        %v321 = vand.u32 %v320, 4294901760
        %v322 = vsub.f32 %v320, %v321
        %v323 = vand.u32 %v322, 4294901760
        %324 = vmatpush1.msra.mxu0 %v323
        %325 = vmatprep.subr.mxu0 0.0
        %v326 = vand.u32 %v172, 4294901760
        %v327 = vsub.f32 %v172, %v326
        %v328 = vand.u32 %v327, 4294901760
        %v329 = vsub.f32 %v327, %v328
        %v330 = vand.u32 %v329, 4294901760
        %331 = vmatpush1.msra.mxu0 %v330
        %332 = vmatprep.subr.mxu0 0.0
        %v333 = vand.u32 %v173, 4294901760
        %v334 = vsub.f32 %v173, %v333
        %v335 = vand.u32 %v334, 4294901760
        %v336 = vsub.f32 %v334, %v335
        %v337 = vand.u32 %v336, 4294901760
        %338 = vmatpush1.msra.mxu0 %v337
        %339 = vmatprep.subr.mxu0 0.0
        %v340 = vand.u32 %v174, 4294901760
        %v341 = vsub.f32 %v174, %v340
        %v342 = vand.u32 %v341, 4294901760
        %v343 = vsub.f32 %v341, %v342
        %v344 = vand.u32 %v343, 4294901760
        %345 = vmatpush1.msra.mxu0 %v344
        %346 = vmatprep.subr.mxu0 0.0
        %v347 = vand.u32 %v175, 4294901760
        %v348 = vsub.f32 %v175, %v347
        %v349 = vand.u32 %v348, 4294901760
        %v350 = vsub.f32 %v348, %v349
        %v351 = vand.u32 %v350, 4294901760
        %352 = vmatpush1.msra.mxu0 %v351
        %353 = vmatprep.subr.mxu0 0.0
        %v354 = vand.u32 %v176, 4294901760
        %v355 = vsub.f32 %v176, %v354
        %v356 = vand.u32 %v355, 4294901760
        %v357 = vsub.f32 %v355, %v356
        %v358 = vand.u32 %v357, 4294901760
        %359 = vmatpush1.msra.mxu0 %v358
        %360 = vmatprep.subr.mxu0 0.0
        %v361 = vand.u32 %v177, 4294901760
        %v362 = vsub.f32 %v177, %v361
        %v363 = vand.u32 %v362, 4294901760
        %v364 = vsub.f32 %v362, %v363
        %v365 = vand.u32 %v364, 4294901760
        %366 = vmatpush1.msra.mxu0 %v365
        %367 = vmatprep.subr.mxu0 0.0
        %v368 = vand.u32 %v178, 4294901760
        %v369 = vsub.f32 %v178, %v368
        %v370 = vand.u32 %v369, 4294901760
        %v371 = vsub.f32 %v369, %v370
        %v372 = vand.u32 %v371, 4294901760
        %373 = vmatpush1.msra.mxu0 %v372
        %374 = vmatprep.subr.mxu0 0.0
        %v375 = vand.u32 %v179, 4294901760
        %v376 = vsub.f32 %v179, %v375
        %v377 = vand.u32 %v376, 4294901760
        %v378 = vsub.f32 %v376, %v377
        %v379 = vand.u32 %v378, 4294901760
        %380 = vmatpush1.msra.mxu0 %v379
        %381 = vmatprep.subr.mxu0 0.0
        %v382 = vand.u32 %v180, 4294901760
        %v383 = vsub.f32 %v180, %v382
        %v384 = vand.u32 %v383, 4294901760
        %v385 = vsub.f32 %v383, %v384
        %v386 = vand.u32 %v385, 4294901760
        %387 = vmatpush1.msra.mxu0 %v386
        %388 = vmatprep.subr.mxu0 0.0
        %v389 = vand.u32 %v181, 4294901760
        %v390 = vsub.f32 %v181, %v389
        %v391 = vand.u32 %v390, 4294901760
        %v392 = vsub.f32 %v390, %v391
        %v393 = vand.u32 %v392, 4294901760
        %394 = vmatpush1.msra.mxu0 %v393
        %395 = vmatprep.subr.mxu0 0.0
        %v396 = vand.u32 %v182, 4294901760
        %v397 = vsub.f32 %v182, %v396
        %v398 = vand.u32 %v397, 4294901760
        %v399 = vsub.f32 %v397, %v398
        %v400 = vand.u32 %v399, 4294901760
        %401 = vmatpush1.msra.mxu0 %v400
        %402 = vmatprep.subr.mxu0 0.0
        %v403 = vand.u32 %v183, 4294901760
        %v404 = vsub.f32 %v183, %v403
        %v405 = vand.u32 %v404, 4294901760
        %v406 = vsub.f32 %v404, %v405
        %v407 = vand.u32 %v406, 4294901760
        %408 = vmatpush1.msra.mxu0 %v407
        %409 = vmatprep.subr.mxu0 0.0
        %v410 = vand.u32 %v184, 4294901760
        %v411 = vsub.f32 %v184, %v410
        %v412 = vand.u32 %v411, 4294901760
        %v413 = vsub.f32 %v411, %v412
        %v414 = vand.u32 %v413, 4294901760
        %415 = vmatpush1.msra.mxu0 %v414
        %416 = vmatprep.subr.mxu0 0.0
        %v417 = vand.u32 %v185, 4294901760
        %v418 = vsub.f32 %v185, %v417
        %v419 = vand.u32 %v418, 4294901760
        %v420 = vsub.f32 %v418, %v419
        %v421 = vand.u32 %v420, 4294901760
        %422 = vmatpush1.msra.mxu0 %v421
        %423 = vmatprep.subr.mxu0 0.0
        %v424 = vand.u32 %v186, 4294901760
        %v425 = vsub.f32 %v186, %v424
        %v426 = vand.u32 %v425, 4294901760
        %v427 = vsub.f32 %v425, %v426
        %v428 = vand.u32 %v427, 4294901760
        %429 = vmatpush1.msra.mxu0 %v428
        %430 = vmatprep.subr.mxu0 0.0
        %v431 = vand.u32 %v187, 4294901760
        %v432 = vsub.f32 %v187, %v431
        %v433 = vand.u32 %v432, 4294901760
        %v434 = vsub.f32 %v432, %v433
        %v435 = vand.u32 %v434, 4294901760
        %436 = vmatpush1.msra.mxu0 %v435
        %437 = vmatprep.subr.mxu0 0.0
        %v438 = vand.u32 %v188, 4294901760
        %v439 = vsub.f32 %v188, %v438
        %v440 = vand.u32 %v439, 4294901760
        %v441 = vsub.f32 %v439, %v440
        %v442 = vand.u32 %v441, 4294901760
        %443 = vmatpush1.msra.mxu0 %v442
        %444 = vmatprep.subr.mxu0 0.0
        %v445 = vand.u32 %v189, 4294901760
        %v446 = vsub.f32 %v189, %v445
        %v447 = vand.u32 %v446, 4294901760
        %v448 = vsub.f32 %v446, %v447
        %v449 = vand.u32 %v448, 4294901760
        %450 = vmatpush1.msra.mxu0 %v449
        %451 = vmatprep.subr.mxu0 0.0
        %v452 = vand.u32 %v190, 4294901760
        %v453 = vsub.f32 %v190, %v452
        %v454 = vand.u32 %v453, 4294901760
        %v455 = vsub.f32 %v453, %v454
        %v456 = vand.u32 %v455, 4294901760
        %457 = vmatpush1.msra.mxu0 %v456
        %458 = vmatprep.subr.mxu0 0.0
        %v459 = vand.u32 %v191, 4294901760
        %v460 = vsub.f32 %v191, %v459
        %v461 = vand.u32 %v460, 4294901760
        %v462 = vsub.f32 %v460, %v461
        %v463 = vand.u32 %v462, 4294901760
        %464 = vmatpush1.msra.mxu0 %v463
        %465 = vmatprep.subr.mxu0 0.0
        %v466 = vand.u32 %v192, 4294901760
        %v467 = vsub.f32 %v192, %v466
        %v468 = vand.u32 %v467, 4294901760
        %v469 = vsub.f32 %v467, %v468
        %v470 = vand.u32 %v469, 4294901760
        %471 = vmatpush1.msra.mxu0 %v470
        %472 = vmatprep.subr.mxu0 0.0
        %v473 = vand.u32 %v193, 4294901760
        %v474 = vsub.f32 %v193, %v473
        %v475 = vand.u32 %v474, 4294901760
        %v476 = vsub.f32 %v474, %v475
        %v477 = vand.u32 %v476, 4294901760
        %478 = vmatpush1.msra.mxu0 %v477
        %479 = vmatprep.subr.mxu0 0.0
        %v480 = vand.u32 %v194, 4294901760
        %v481 = vsub.f32 %v194, %v480
        %v482 = vand.u32 %v481, 4294901760
        %v483 = vsub.f32 %v481, %v482
        %v484 = vand.u32 %v483, 4294901760
        %485 = vmatpush1.msra.mxu0 %v484
        %486 = vmatprep.subr.mxu0 0.0
        %v487 = vand.u32 %v195, 4294901760
        %v488 = vsub.f32 %v195, %v487
        %v489 = vand.u32 %v488, 4294901760
        %v490 = vsub.f32 %v488, %v489
        %v491 = vand.u32 %v490, 4294901760
        %492 = vmatpush1.msra.mxu0 %v491
        %493 = vmatprep.subr.mxu0 0.0
        %v494 = vand.u32 %v196, 4294901760
        %v495 = vsub.f32 %v196, %v494
        %v496 = vand.u32 %v495, 4294901760
        %v497 = vsub.f32 %v495, %v496
        %v498 = vand.u32 %v497, 4294901760
        %499 = vmatpush1.msra.mxu0 %v498
        %500 = vmatprep.subr.mxu0 0.0
        %v501 = vand.u32 %v197, 4294901760
        %v502 = vsub.f32 %v197, %v501
        %v503 = vand.u32 %v502, 4294901760
        %v504 = vsub.f32 %v502, %v503
        %v505 = vand.u32 %v504, 4294901760
        %506 = vmatpush1.msra.mxu0 %v505
        %507 = vmatprep.subr.mxu0 0.0
        %v508 = vand.u32 %v198, 4294901760
        %v509 = vsub.f32 %v198, %v508
        %v510 = vand.u32 %v509, 4294901760
        %v511 = vsub.f32 %v509, %v510
        %v512 = vand.u32 %v511, 4294901760
        %513 = vmatpush1.msra.mxu0 %v512
        %514 = vmatprep.subr.mxu0 0.0
        %v515 = vand.u32 %v199, 4294901760
        %v516 = vsub.f32 %v199, %v515
        %v517 = vand.u32 %v516, 4294901760
        %v518 = vsub.f32 %v516, %v517
        %v519 = vand.u32 %v518, 4294901760
        %520 = vmatpush1.msra.mxu0 %v519
        %521 = vmatprep.subr.mxu0 0.0
        %v522 = vand.u32 %v200, 4294901760
        %v523 = vsub.f32 %v200, %v522
        %v524 = vand.u32 %v523, 4294901760
        %v525 = vsub.f32 %v523, %v524
        %v526 = vand.u32 %v525, 4294901760
        %527 = vmatpush1.msra.mxu0 %v526
        %528 = vmatprep.subr.mxu0 0.0
        %v529 = vand.u32 %v201, 4294901760
        %v530 = vsub.f32 %v201, %v529
        %v531 = vand.u32 %v530, 4294901760
        %v532 = vsub.f32 %v530, %v531
        %v533 = vand.u32 %v532, 4294901760
        %534 = vmatpush1.msra.mxu0 %v533
        %535 = vmatprep.subr.mxu0 0.0
        %v536 = vand.u32 %v202, 4294901760
        %v537 = vsub.f32 %v202, %v536
        %v538 = vand.u32 %v537, 4294901760
        %v539 = vsub.f32 %v537, %v538
        %v540 = vand.u32 %v539, 4294901760
        %541 = vmatpush1.msra.mxu0 %v540
        %v542 = vand.u32 %v204, 4294901760
        %543 = vmatprep.mubr.f32.mxu0 %v542
        %v544 = vand.u32 %v170, 4294901760
        %545 = vmatmul.mubr.f32.gmra.mrb[0].mxu0 %v544
        %v546 = vpop.f32.mrb[0].mxu0
        %v547 = vadd.f32 %v315, %v546
        %v548 = vpop.f32.mrb[0].mxu0
        %549 = vdwg.mxu0
        %550 = vmatprep.subr.mxu0 0.0
        %v551 = vand.u32 %v171, 4294901760
        %v552 = vsub.f32 %v171, %v551
        %553 = vmatpush1.msra.mxu0 %v552
        %554 = vmatprep.subr.mxu0 0.0
        %v555 = vand.u32 %v172, 4294901760
        %v556 = vsub.f32 %v172, %v555
        %557 = vmatpush1.msra.mxu0 %v556
        %558 = vmatprep.subr.mxu0 0.0
        %v559 = vand.u32 %v173, 4294901760
        %v560 = vsub.f32 %v173, %v559
        %561 = vmatpush1.msra.mxu0 %v560
        %562 = vmatprep.subr.mxu0 0.0
        %v563 = vand.u32 %v174, 4294901760
        %v564 = vsub.f32 %v174, %v563
        %565 = vmatpush1.msra.mxu0 %v564
        %566 = vmatprep.subr.mxu0 0.0
        %v567 = vand.u32 %v175, 4294901760
        %v568 = vsub.f32 %v175, %v567
        %569 = vmatpush1.msra.mxu0 %v568
        %570 = vmatprep.subr.mxu0 0.0
        %v571 = vand.u32 %v176, 4294901760
        %v572 = vsub.f32 %v176, %v571
        %573 = vmatpush1.msra.mxu0 %v572
        %574 = vmatprep.subr.mxu0 0.0
        %v575 = vand.u32 %v177, 4294901760
        %v576 = vsub.f32 %v177, %v575
        %577 = vmatpush1.msra.mxu0 %v576
        %578 = vmatprep.subr.mxu0 0.0
        %v579 = vand.u32 %v178, 4294901760
        %v580 = vsub.f32 %v178, %v579
        %581 = vmatpush1.msra.mxu0 %v580
        %582 = vmatprep.subr.mxu0 0.0
        %v583 = vand.u32 %v179, 4294901760
        %v584 = vsub.f32 %v179, %v583
        %585 = vmatpush1.msra.mxu0 %v584
        %586 = vmatprep.subr.mxu0 0.0
        %v587 = vand.u32 %v180, 4294901760
        %v588 = vsub.f32 %v180, %v587
        %589 = vmatpush1.msra.mxu0 %v588
        %590 = vmatprep.subr.mxu0 0.0
        %v591 = vand.u32 %v181, 4294901760
        %v592 = vsub.f32 %v181, %v591
        %593 = vmatpush1.msra.mxu0 %v592
        %594 = vmatprep.subr.mxu0 0.0
        %v595 = vand.u32 %v182, 4294901760
        %v596 = vsub.f32 %v182, %v595
        %597 = vmatpush1.msra.mxu0 %v596
        %598 = vmatprep.subr.mxu0 0.0
        %v599 = vand.u32 %v183, 4294901760
        %v600 = vsub.f32 %v183, %v599
        %601 = vmatpush1.msra.mxu0 %v600
        %602 = vmatprep.subr.mxu0 0.0
        %v603 = vand.u32 %v184, 4294901760
        %v604 = vsub.f32 %v184, %v603
        %605 = vmatpush1.msra.mxu0 %v604
        %606 = vmatprep.subr.mxu0 0.0
        %v607 = vand.u32 %v185, 4294901760
        %v608 = vsub.f32 %v185, %v607
        %609 = vmatpush1.msra.mxu0 %v608
        %610 = vmatprep.subr.mxu0 0.0
        %v611 = vand.u32 %v186, 4294901760
        %v612 = vsub.f32 %v186, %v611
        %613 = vmatpush1.msra.mxu0 %v612
        %614 = vmatprep.subr.mxu0 0.0
        %v615 = vand.u32 %v187, 4294901760
        %v616 = vsub.f32 %v187, %v615
        %617 = vmatpush1.msra.mxu0 %v616
        %618 = vmatprep.subr.mxu0 0.0
        %v619 = vand.u32 %v188, 4294901760
        %v620 = vsub.f32 %v188, %v619
        %621 = vmatpush1.msra.mxu0 %v620
        %622 = vmatprep.subr.mxu0 0.0
        %v623 = vand.u32 %v189, 4294901760
        %v624 = vsub.f32 %v189, %v623
        %625 = vmatpush1.msra.mxu0 %v624
        %626 = vmatprep.subr.mxu0 0.0
        %v627 = vand.u32 %v190, 4294901760
        %v628 = vsub.f32 %v190, %v627
        %629 = vmatpush1.msra.mxu0 %v628
        %630 = vmatprep.subr.mxu0 0.0
        %v631 = vand.u32 %v191, 4294901760
        %v632 = vsub.f32 %v191, %v631
        %633 = vmatpush1.msra.mxu0 %v632
        %634 = vmatprep.subr.mxu0 0.0
        %v635 = vand.u32 %v192, 4294901760
        %v636 = vsub.f32 %v192, %v635
        %637 = vmatpush1.msra.mxu0 %v636
        %638 = vmatprep.subr.mxu0 0.0
        %v639 = vand.u32 %v193, 4294901760
        %v640 = vsub.f32 %v193, %v639
        %641 = vmatpush1.msra.mxu0 %v640
        %642 = vmatprep.subr.mxu0 0.0
        %v643 = vand.u32 %v194, 4294901760
        %v644 = vsub.f32 %v194, %v643
        %645 = vmatpush1.msra.mxu0 %v644
        %646 = vmatprep.subr.mxu0 0.0
        %v647 = vand.u32 %v195, 4294901760
        %v648 = vsub.f32 %v195, %v647
        %649 = vmatpush1.msra.mxu0 %v648
        %650 = vmatprep.subr.mxu0 0.0
        %v651 = vand.u32 %v196, 4294901760
        %v652 = vsub.f32 %v196, %v651
        %653 = vmatpush1.msra.mxu0 %v652
        %654 = vmatprep.subr.mxu0 0.0
        %v655 = vand.u32 %v197, 4294901760
        %v656 = vsub.f32 %v197, %v655
        %657 = vmatpush1.msra.mxu0 %v656
        %658 = vmatprep.subr.mxu0 0.0
        %v659 = vand.u32 %v198, 4294901760
        %v660 = vsub.f32 %v198, %v659
        %661 = vmatpush1.msra.mxu0 %v660
        %662 = vmatprep.subr.mxu0 0.0
        %v663 = vand.u32 %v199, 4294901760
        %v664 = vsub.f32 %v199, %v663
        %665 = vmatpush1.msra.mxu0 %v664
        %666 = vmatprep.subr.mxu0 0.0
        %v667 = vand.u32 %v200, 4294901760
        %v668 = vsub.f32 %v200, %v667
        %669 = vmatpush1.msra.mxu0 %v668
        %670 = vmatprep.subr.mxu0 0.0
        %v671 = vand.u32 %v201, 4294901760
        %v672 = vsub.f32 %v201, %v671
        %673 = vmatpush1.msra.mxu0 %v672
        %674 = vmatprep.subr.mxu0 0.0
        %v675 = vand.u32 %v202, 4294901760
        %v676 = vsub.f32 %v202, %v675
        %677 = vmatpush1.msra.mxu0 %v676
        %v678 = vand.u32 %v204, 4294901760
        %v679 = vsub.f32 %v204, %v678
        %680 = vmatprep.mubr.f32.mxu0 %v679
        %v681 = vand.u32 %v170, 4294901760
        %v682 = vsub.f32 %v170, %v681
        %683 = vmatmul.mubr.f32.gmra.mrb[0].mxu0 %v682
        %v684 = vpop.f32.mrb[0].mxu0
        %v685 = vadd.f32 %v547, %v684
        %v686 = vpop.f32.mrb[0].mxu0
        %687 = vdwg.mxu0
        %688 = vmatprep.subr.mxu0 0.0
        %v689 = vand.u32 %v171, 4294901760
        %690 = vmatpush1.msra.mxu0 %v689
        %691 = vmatprep.subr.mxu0 0.0
        %v692 = vand.u32 %v172, 4294901760
        %693 = vmatpush1.msra.mxu0 %v692
        %694 = vmatprep.subr.mxu0 0.0
        %v695 = vand.u32 %v173, 4294901760
        %696 = vmatpush1.msra.mxu0 %v695
        %697 = vmatprep.subr.mxu0 0.0
        %v698 = vand.u32 %v174, 4294901760
        %699 = vmatpush1.msra.mxu0 %v698
        %700 = vmatprep.subr.mxu0 0.0
        %v701 = vand.u32 %v175, 4294901760
        %702 = vmatpush1.msra.mxu0 %v701
        %703 = vmatprep.subr.mxu0 0.0
        %v704 = vand.u32 %v176, 4294901760
        %705 = vmatpush1.msra.mxu0 %v704
        %706 = vmatprep.subr.mxu0 0.0
        %v707 = vand.u32 %v177, 4294901760
        %708 = vmatpush1.msra.mxu0 %v707
        %709 = vmatprep.subr.mxu0 0.0
        %v710 = vand.u32 %v178, 4294901760
        %711 = vmatpush1.msra.mxu0 %v710
        %712 = vmatprep.subr.mxu0 0.0
        %v713 = vand.u32 %v179, 4294901760
        %714 = vmatpush1.msra.mxu0 %v713
        %715 = vmatprep.subr.mxu0 0.0
        %v716 = vand.u32 %v180, 4294901760
        %717 = vmatpush1.msra.mxu0 %v716
        %718 = vmatprep.subr.mxu0 0.0
        %v719 = vand.u32 %v181, 4294901760
        %720 = vmatpush1.msra.mxu0 %v719
        %721 = vmatprep.subr.mxu0 0.0
        %v722 = vand.u32 %v182, 4294901760
        %723 = vmatpush1.msra.mxu0 %v722
        %724 = vmatprep.subr.mxu0 0.0
        %v725 = vand.u32 %v183, 4294901760
        %726 = vmatpush1.msra.mxu0 %v725
        %727 = vmatprep.subr.mxu0 0.0
        %v728 = vand.u32 %v184, 4294901760
        %729 = vmatpush1.msra.mxu0 %v728
        %730 = vmatprep.subr.mxu0 0.0
        %v731 = vand.u32 %v185, 4294901760
        %732 = vmatpush1.msra.mxu0 %v731
        %733 = vmatprep.subr.mxu0 0.0
        %v734 = vand.u32 %v186, 4294901760
        %735 = vmatpush1.msra.mxu0 %v734
        %736 = vmatprep.subr.mxu0 0.0
        %v737 = vand.u32 %v187, 4294901760
        %738 = vmatpush1.msra.mxu0 %v737
        %739 = vmatprep.subr.mxu0 0.0
        %v740 = vand.u32 %v188, 4294901760
        %741 = vmatpush1.msra.mxu0 %v740
        %742 = vmatprep.subr.mxu0 0.0
        %v743 = vand.u32 %v189, 4294901760
        %744 = vmatpush1.msra.mxu0 %v743
        %745 = vmatprep.subr.mxu0 0.0
        %v746 = vand.u32 %v190, 4294901760
        %747 = vmatpush1.msra.mxu0 %v746
        %748 = vmatprep.subr.mxu0 0.0
        %v749 = vand.u32 %v191, 4294901760
        %750 = vmatpush1.msra.mxu0 %v749
        %751 = vmatprep.subr.mxu0 0.0
        %v752 = vand.u32 %v192, 4294901760
        %753 = vmatpush1.msra.mxu0 %v752
        %754 = vmatprep.subr.mxu0 0.0
        %v755 = vand.u32 %v193, 4294901760
        %756 = vmatpush1.msra.mxu0 %v755
        %757 = vmatprep.subr.mxu0 0.0
        %v758 = vand.u32 %v194, 4294901760
        %759 = vmatpush1.msra.mxu0 %v758
        %760 = vmatprep.subr.mxu0 0.0
        %v761 = vand.u32 %v195, 4294901760
        %762 = vmatpush1.msra.mxu0 %v761
        %763 = vmatprep.subr.mxu0 0.0
        %v764 = vand.u32 %v196, 4294901760
        %765 = vmatpush1.msra.mxu0 %v764
        %766 = vmatprep.subr.mxu0 0.0
        %v767 = vand.u32 %v197, 4294901760
        %768 = vmatpush1.msra.mxu0 %v767
        %769 = vmatprep.subr.mxu0 0.0
        %v770 = vand.u32 %v198, 4294901760
        %771 = vmatpush1.msra.mxu0 %v770
        %772 = vmatprep.subr.mxu0 0.0
        %v773 = vand.u32 %v199, 4294901760
        %774 = vmatpush1.msra.mxu0 %v773
        %775 = vmatprep.subr.mxu0 0.0
        %v776 = vand.u32 %v200, 4294901760
        %777 = vmatpush1.msra.mxu0 %v776
        %778 = vmatprep.subr.mxu0 0.0
        %v779 = vand.u32 %v201, 4294901760
        %780 = vmatpush1.msra.mxu0 %v779
        %781 = vmatprep.subr.mxu0 0.0
        %v782 = vand.u32 %v202, 4294901760
        %783 = vmatpush1.msra.mxu0 %v782
        %v784 = vand.u32 %v204, 4294901760
        %v785 = vsub.f32 %v204, %v784
        %v786 = vand.u32 %v785, 4294901760
        %787 = vmatprep.mubr.f32.mxu0 %v786
        %v788 = vand.u32 %v170, 4294901760
        %v789 = vsub.f32 %v170, %v788
        %v790 = vand.u32 %v789, 4294901760
        %791 = vmatmul.mubr.f32.gmra.mrb[0].mxu0 %v790
        %v792 = vpop.f32.mrb[0].mxu0
        %v793 = vadd.f32 %v685, %v792
        %v794 = vpop.f32.mrb[0].mxu0
        %795 = vdwg.mxu0
        %796 = vmatprep.subr.mxu0 0.0
        %v797 = vand.u32 %v171, 4294901760
        %v798 = vsub.f32 %v171, %v797
        %v799 = vand.u32 %v798, 4294901760
        %800 = vmatpush1.msra.mxu0 %v799
        %801 = vmatprep.subr.mxu0 0.0
        %v802 = vand.u32 %v172, 4294901760
        %v803 = vsub.f32 %v172, %v802
        %v804 = vand.u32 %v803, 4294901760
        %805 = vmatpush1.msra.mxu0 %v804
        %806 = vmatprep.subr.mxu0 0.0
        %v807 = vand.u32 %v173, 4294901760
        %v808 = vsub.f32 %v173, %v807
        %v809 = vand.u32 %v808, 4294901760
        %810 = vmatpush1.msra.mxu0 %v809
        %811 = vmatprep.subr.mxu0 0.0
        %v812 = vand.u32 %v174, 4294901760
        %v813 = vsub.f32 %v174, %v812
        %v814 = vand.u32 %v813, 4294901760
        %815 = vmatpush1.msra.mxu0 %v814
        %816 = vmatprep.subr.mxu0 0.0
        %v817 = vand.u32 %v175, 4294901760
        %v818 = vsub.f32 %v175, %v817
        %v819 = vand.u32 %v818, 4294901760
        %820 = vmatpush1.msra.mxu0 %v819
        %821 = vmatprep.subr.mxu0 0.0
        %v822 = vand.u32 %v176, 4294901760
        %v823 = vsub.f32 %v176, %v822
        %v824 = vand.u32 %v823, 4294901760
        %825 = vmatpush1.msra.mxu0 %v824
        %826 = vmatprep.subr.mxu0 0.0
        %v827 = vand.u32 %v177, 4294901760
        %v828 = vsub.f32 %v177, %v827
        %v829 = vand.u32 %v828, 4294901760
        %830 = vmatpush1.msra.mxu0 %v829
        %831 = vmatprep.subr.mxu0 0.0
        %v832 = vand.u32 %v178, 4294901760
        %v833 = vsub.f32 %v178, %v832
        %v834 = vand.u32 %v833, 4294901760
        %835 = vmatpush1.msra.mxu0 %v834
        %836 = vmatprep.subr.mxu0 0.0
        %v837 = vand.u32 %v179, 4294901760
        %v838 = vsub.f32 %v179, %v837
        %v839 = vand.u32 %v838, 4294901760
        %840 = vmatpush1.msra.mxu0 %v839
        %841 = vmatprep.subr.mxu0 0.0
        %v842 = vand.u32 %v180, 4294901760
        %v843 = vsub.f32 %v180, %v842
        %v844 = vand.u32 %v843, 4294901760
        %845 = vmatpush1.msra.mxu0 %v844
        %846 = vmatprep.subr.mxu0 0.0
        %v847 = vand.u32 %v181, 4294901760
        %v848 = vsub.f32 %v181, %v847
        %v849 = vand.u32 %v848, 4294901760
        %850 = vmatpush1.msra.mxu0 %v849
        %851 = vmatprep.subr.mxu0 0.0
        %v852 = vand.u32 %v182, 4294901760
        %v853 = vsub.f32 %v182, %v852
        %v854 = vand.u32 %v853, 4294901760
        %855 = vmatpush1.msra.mxu0 %v854
        %856 = vmatprep.subr.mxu0 0.0
        %v857 = vand.u32 %v183, 4294901760
        %v858 = vsub.f32 %v183, %v857
        %v859 = vand.u32 %v858, 4294901760
        %860 = vmatpush1.msra.mxu0 %v859
        %861 = vmatprep.subr.mxu0 0.0
        %v862 = vand.u32 %v184, 4294901760
        %v863 = vsub.f32 %v184, %v862
        %v864 = vand.u32 %v863, 4294901760
        %865 = vmatpush1.msra.mxu0 %v864
        %866 = vmatprep.subr.mxu0 0.0
        %v867 = vand.u32 %v185, 4294901760
        %v868 = vsub.f32 %v185, %v867
        %v869 = vand.u32 %v868, 4294901760
        %870 = vmatpush1.msra.mxu0 %v869
        %871 = vmatprep.subr.mxu0 0.0
        %v872 = vand.u32 %v186, 4294901760
        %v873 = vsub.f32 %v186, %v872
        %v874 = vand.u32 %v873, 4294901760
        %875 = vmatpush1.msra.mxu0 %v874
        %876 = vmatprep.subr.mxu0 0.0
        %v877 = vand.u32 %v187, 4294901760
        %v878 = vsub.f32 %v187, %v877
        %v879 = vand.u32 %v878, 4294901760
        %880 = vmatpush1.msra.mxu0 %v879
        %881 = vmatprep.subr.mxu0 0.0
        %v882 = vand.u32 %v188, 4294901760
        %v883 = vsub.f32 %v188, %v882
        %v884 = vand.u32 %v883, 4294901760
        %885 = vmatpush1.msra.mxu0 %v884
        %886 = vmatprep.subr.mxu0 0.0
        %v887 = vand.u32 %v189, 4294901760
        %v888 = vsub.f32 %v189, %v887
        %v889 = vand.u32 %v888, 4294901760
        %890 = vmatpush1.msra.mxu0 %v889
        %891 = vmatprep.subr.mxu0 0.0
        %v892 = vand.u32 %v190, 4294901760
        %v893 = vsub.f32 %v190, %v892
        %v894 = vand.u32 %v893, 4294901760
        %895 = vmatpush1.msra.mxu0 %v894
        %896 = vmatprep.subr.mxu0 0.0
        %v897 = vand.u32 %v191, 4294901760
        %v898 = vsub.f32 %v191, %v897
        %v899 = vand.u32 %v898, 4294901760
        %900 = vmatpush1.msra.mxu0 %v899
        %901 = vmatprep.subr.mxu0 0.0
        %v902 = vand.u32 %v192, 4294901760
        %v903 = vsub.f32 %v192, %v902
        %v904 = vand.u32 %v903, 4294901760
        %905 = vmatpush1.msra.mxu0 %v904
        %906 = vmatprep.subr.mxu0 0.0
        %v907 = vand.u32 %v193, 4294901760
        %v908 = vsub.f32 %v193, %v907
        %v909 = vand.u32 %v908, 4294901760
        %910 = vmatpush1.msra.mxu0 %v909
        %911 = vmatprep.subr.mxu0 0.0
        %v912 = vand.u32 %v194, 4294901760
        %v913 = vsub.f32 %v194, %v912
        %v914 = vand.u32 %v913, 4294901760
        %915 = vmatpush1.msra.mxu0 %v914
        %916 = vmatprep.subr.mxu0 0.0
        %v917 = vand.u32 %v195, 4294901760
        %v918 = vsub.f32 %v195, %v917
        %v919 = vand.u32 %v918, 4294901760
        %920 = vmatpush1.msra.mxu0 %v919
        %921 = vmatprep.subr.mxu0 0.0
        %v922 = vand.u32 %v196, 4294901760
        %v923 = vsub.f32 %v196, %v922
        %v924 = vand.u32 %v923, 4294901760
        %925 = vmatpush1.msra.mxu0 %v924
        %926 = vmatprep.subr.mxu0 0.0
        %v927 = vand.u32 %v197, 4294901760
        %v928 = vsub.f32 %v197, %v927
        %v929 = vand.u32 %v928, 4294901760
        %930 = vmatpush1.msra.mxu0 %v929
        %931 = vmatprep.subr.mxu0 0.0
        %v932 = vand.u32 %v198, 4294901760
        %v933 = vsub.f32 %v198, %v932
        %v934 = vand.u32 %v933, 4294901760
        %935 = vmatpush1.msra.mxu0 %v934
        %936 = vmatprep.subr.mxu0 0.0
        %v937 = vand.u32 %v199, 4294901760
        %v938 = vsub.f32 %v199, %v937
        %v939 = vand.u32 %v938, 4294901760
        %940 = vmatpush1.msra.mxu0 %v939
        %941 = vmatprep.subr.mxu0 0.0
        %v942 = vand.u32 %v200, 4294901760
        %v943 = vsub.f32 %v200, %v942
        %v944 = vand.u32 %v943, 4294901760
        %945 = vmatpush1.msra.mxu0 %v944
        %946 = vmatprep.subr.mxu0 0.0
        %v947 = vand.u32 %v201, 4294901760
        %v948 = vsub.f32 %v201, %v947
        %v949 = vand.u32 %v948, 4294901760
        %950 = vmatpush1.msra.mxu0 %v949
        %951 = vmatprep.subr.mxu0 0.0
        %v952 = vand.u32 %v202, 4294901760
        %v953 = vsub.f32 %v202, %v952
        %v954 = vand.u32 %v953, 4294901760
        %955 = vmatpush1.msra.mxu0 %v954
        %v956 = vand.u32 %v204, 4294901760
        %957 = vmatprep.mubr.f32.mxu0 %v956
        %v958 = vand.u32 %v170, 4294901760
        %959 = vmatmul.mubr.f32.gmra.mrb[0].mxu0 %v958
        %v960 = vpop.f32.mrb[0].mxu0
        %v961 = vadd.f32 %v793, %v960
        %v962 = vpop.f32.mrb[0].mxu0
        %963 = vdwg.mxu0
        %964 = vmatprep.subr.mxu0 0.0
        %v965 = vand.u32 %v171, 4294901760
        %966 = vmatpush1.msra.mxu0 %v965
        %967 = vmatprep.subr.mxu0 0.0
        %v968 = vand.u32 %v172, 4294901760
        %969 = vmatpush1.msra.mxu0 %v968
        %970 = vmatprep.subr.mxu0 0.0
        %v971 = vand.u32 %v173, 4294901760
        %972 = vmatpush1.msra.mxu0 %v971
        %973 = vmatprep.subr.mxu0 0.0
        %v974 = vand.u32 %v174, 4294901760
        %975 = vmatpush1.msra.mxu0 %v974
        %976 = vmatprep.subr.mxu0 0.0
        %v977 = vand.u32 %v175, 4294901760
        %978 = vmatpush1.msra.mxu0 %v977
        %979 = vmatprep.subr.mxu0 0.0
        %v980 = vand.u32 %v176, 4294901760
        %981 = vmatpush1.msra.mxu0 %v980
        %982 = vmatprep.subr.mxu0 0.0
        %v983 = vand.u32 %v177, 4294901760
        %984 = vmatpush1.msra.mxu0 %v983
        %985 = vmatprep.subr.mxu0 0.0
        %v986 = vand.u32 %v178, 4294901760
        %987 = vmatpush1.msra.mxu0 %v986
        %988 = vmatprep.subr.mxu0 0.0
        %v989 = vand.u32 %v179, 4294901760
        %990 = vmatpush1.msra.mxu0 %v989
        %991 = vmatprep.subr.mxu0 0.0
        %v992 = vand.u32 %v180, 4294901760
        %993 = vmatpush1.msra.mxu0 %v992
        %994 = vmatprep.subr.mxu0 0.0
        %v995 = vand.u32 %v181, 4294901760
        %996 = vmatpush1.msra.mxu0 %v995
        %997 = vmatprep.subr.mxu0 0.0
        %v998 = vand.u32 %v182, 4294901760
        %999 = vmatpush1.msra.mxu0 %v998
        %1000 = vmatprep.subr.mxu0 0.0
        %v1001 = vand.u32 %v183, 4294901760
        %1002 = vmatpush1.msra.mxu0 %v1001
        %1003 = vmatprep.subr.mxu0 0.0
        %v1004 = vand.u32 %v184, 4294901760
        %1005 = vmatpush1.msra.mxu0 %v1004
        %1006 = vmatprep.subr.mxu0 0.0
        %v1007 = vand.u32 %v185, 4294901760
        %1008 = vmatpush1.msra.mxu0 %v1007
        %1009 = vmatprep.subr.mxu0 0.0
        %v1010 = vand.u32 %v186, 4294901760
        %1011 = vmatpush1.msra.mxu0 %v1010
        %1012 = vmatprep.subr.mxu0 0.0
        %v1013 = vand.u32 %v187, 4294901760
        %1014 = vmatpush1.msra.mxu0 %v1013
        %1015 = vmatprep.subr.mxu0 0.0
        %v1016 = vand.u32 %v188, 4294901760
        %1017 = vmatpush1.msra.mxu0 %v1016
        %1018 = vmatprep.subr.mxu0 0.0
        %v1019 = vand.u32 %v189, 4294901760
        %1020 = vmatpush1.msra.mxu0 %v1019
        %1021 = vmatprep.subr.mxu0 0.0
        %v1022 = vand.u32 %v190, 4294901760
        %1023 = vmatpush1.msra.mxu0 %v1022
        %1024 = vmatprep.subr.mxu0 0.0
        %v1025 = vand.u32 %v191, 4294901760
        %1026 = vmatpush1.msra.mxu0 %v1025
        %1027 = vmatprep.subr.mxu0 0.0
        %v1028 = vand.u32 %v192, 4294901760
        %1029 = vmatpush1.msra.mxu0 %v1028
        %1030 = vmatprep.subr.mxu0 0.0
        %v1031 = vand.u32 %v193, 4294901760
        %1032 = vmatpush1.msra.mxu0 %v1031
        %1033 = vmatprep.subr.mxu0 0.0
        %v1034 = vand.u32 %v194, 4294901760
        %1035 = vmatpush1.msra.mxu0 %v1034
        %1036 = vmatprep.subr.mxu0 0.0
        %v1037 = vand.u32 %v195, 4294901760
        %1038 = vmatpush1.msra.mxu0 %v1037
        %1039 = vmatprep.subr.mxu0 0.0
        %v1040 = vand.u32 %v196, 4294901760
        %1041 = vmatpush1.msra.mxu0 %v1040
        %1042 = vmatprep.subr.mxu0 0.0
        %v1043 = vand.u32 %v197, 4294901760
        %1044 = vmatpush1.msra.mxu0 %v1043
        %1045 = vmatprep.subr.mxu0 0.0
        %v1046 = vand.u32 %v198, 4294901760
        %1047 = vmatpush1.msra.mxu0 %v1046
        %1048 = vmatprep.subr.mxu0 0.0
        %v1049 = vand.u32 %v199, 4294901760
        %1050 = vmatpush1.msra.mxu0 %v1049
        %1051 = vmatprep.subr.mxu0 0.0
        %v1052 = vand.u32 %v200, 4294901760
        %1053 = vmatpush1.msra.mxu0 %v1052
        %1054 = vmatprep.subr.mxu0 0.0
        %v1055 = vand.u32 %v201, 4294901760
        %1056 = vmatpush1.msra.mxu0 %v1055
        %1057 = vmatprep.subr.mxu0 0.0
        %v1058 = vand.u32 %v202, 4294901760
        %1059 = vmatpush1.msra.mxu0 %v1058
        %v1060 = vand.u32 %v204, 4294901760
        %1061 = vmatprep.mubr.f32.mxu0 %v1060
        %v1062 = vand.u32 %v170, 4294901760
        %1063 = vmatmul.mubr.f32.gmra.mrb[0].mxu0 %v1062
        %v1064 = vpop.f32.mrb[0].mxu0
        %v1065 = vadd.f32 %v961, %v1064
        %v1066 = vpop.f32.mrb[0].mxu0
        %1067 = vdwg.mxu0
        %vm1068 = vcmask 519168
        %1069 = vst.msk [vmem:[%s160] sm:$0xf] %vm1068, %v1065
        %s1070 = scalar_lea.vmem %s160, 4 [#allocation2]
        %1071 = vst.msk [vmem:[%s1070] sm:$0xf] %vm1068, 0.0
        %s1072 = sand.u32 %s87, 1
        %s1073 = scalar_lea.sflag [#allocation3], %s1072
        %s1074 = sand.u32 %s87, 1
        %s1075 = smul.addr %s1074, 8
        %s1076 = scalar_lea.vmem [#allocation2], %s1075
        // Predicated region
        $region29: #{tpu_custom_call.1} parent=27 // pred_check
          %p1077 = pneg %p97
        $region30: #{tpu_custom_call.1} parent=27 // pred_check_branch
          %1079 = sbr.rel (%p1077) target = $region32
        $region31: #{tpu_custom_call.1} parent=27 // pred_region
          %s1081 = ssub.s32 128, 128
          %1082 = vsyncadd %s1073, %s1081
          %s1083 = smul.addr %s20, 2
          %s1084 = sadd.s32 %s21, %s1083
          %s1085 = smul.addr %s1084, 64
          %s1086 = scalar_lea.hbm %s2, %s1085
          %s1087 = sshll.u32 %s1076, 4
          %s1088 = int_to_ptr.vmem [resolvable:$true] %s1087
          %1093 = dma.vmem_to_hbm [thread:$0]  %s1088, 128, %s1086, %s1073, 64, 64, 4
        $region32: #{tpu_custom_call.1} parent=27 // pred_fallthru
          _
      $region28: #{tpu_custom_call.1} parent=5 // pred_fallthru
        _
      %p1094 = scmp.le.s32.totalorder 2, %s11
      // Predicated region
      $region33: #{tpu_custom_call.1} parent=5 // pred_check
        %p1095 = pneg %p1094
      $region34: #{tpu_custom_call.1} parent=5 // pred_check_branch
        %1097 = sbr.rel (%p1095) target = $region36
      $region35: #{tpu_custom_call.1} parent=5 // pred_region
        %s1098 = ssub.s32 %s11, 2
        // Predicated region
        $region37: #{tpu_custom_call.1} parent=35 // pred_check
          %p1099 = pneg %p103
        $region38: #{tpu_custom_call.1} parent=35 // pred_check_branch
          %1101 = sbr.rel (%p1099) target = $region40
        $region39: #{tpu_custom_call.1} parent=35 // pred_region
          %s1102 = sand.u32 %s88, 1
          %s1103 = scalar_lea.sflag [#allocation3], %s1102
          %s1104 = sand.u32 %s88, 1
          %s1105 = smul.addr %s1104, 8
          %s1106 = scalar_lea.vmem [#allocation2], %s1105
          %1107 = dma.done %s1103, 128
        $region40: #{tpu_custom_call.1} parent=35 // pred_fallthru
          _
      $region36: #{tpu_custom_call.1} parent=5 // pred_fallthru
        _
    $region6: #{tpu_custom_call.1} parent=1 // loop_footer
      %s15 = sadd.s32 1, %s11
    $region7: #{tpu_custom_call.1} parent=1 // loop_footer_branch
      %10 = sbr.rel target = $region3
    $region8: #{tpu_custom_call.1} parent=1 // loop_exit
      _
    %1108 = vsyncpa [#allocation3], 1
    %s1109 = scalar_lea.sflag [#allocation3], 1
    %1110 = vsyncpa %s1109, 1

</llo_original>
